<compile_context>
chip_gen: v6e
topology: v6e:2x2x1
jax: 0.10.0
libtpu: 0.0.40
codegen_flags: <defaults>
</compile_context>

<pallas_src>
import jax
import jax.numpy as jnp
from jax import lax
from jax.experimental import pallas as pl
from jax.experimental.pallas import tpu as pltpu

INPUT_SIZE = 256
HIDDEN_SIZE = 128
PAD = 128     # lane width of the fused stage-C output (internal slab)
OUT_W = 8     # narrow HBM output width: lanes 0..2 probs, lane 3 conf, 4..7 zero


def _direction_predictor_kernel(x_ref, wa_ref, ba_ref, wb_ref, bb_ref,
                                wc_ref, bc_ref, out_ref):
    x = x_ref[...]                                                     # (TB, 256) bf16

    # Stage A: fused direction-L1 + confidence-L1 (shared input x), ReLU.
    h = jnp.dot(x, wa_ref[...], preferred_element_type=jnp.float32) + ba_ref[...]
    h = jnp.maximum(h, 0.0)                                            # (TB,256) = [h1|c1|0]

    # Stage B: direction-L2 + identity passthrough of c1, ReLU (c1 >= 0 so id).
    h = jnp.dot(h.astype(jnp.bfloat16), wb_ref[...],
                preferred_element_type=jnp.float32) + bb_ref[...]
    h = jnp.maximum(h, 0.0)                                            # (TB,128) = [h2|c1]

    # Stage C: block-diagonal final layer -> lanes 0..2 logits, lane 3 conf pre-act.
    z = jnp.dot(h.astype(jnp.bfloat16), wc_ref[...],
                preferred_element_type=jnp.float32) + bc_ref[...]      # (TB,128) f32

    lane = lax.broadcasted_iota(jnp.int32, z.shape, 1)
    is_dir = lane < 3
    is_conf = lane == 3

    # --- single-exp epilogue: softmax (lanes 0..2) + stable sigmoid (lane 3) ---
    neg = jnp.float32(-1e30)
    m = jnp.max(jnp.where(is_dir, z, neg), axis=-1, keepdims=True)     # row max over dir lanes
    arg = jnp.where(is_dir, z - m, jnp.where(is_conf, -jnp.abs(z), neg))
    e = jnp.exp(arg)                                                   # ONE full-slab EUP pass
    denom = jnp.sum(jnp.where(is_dir, e, 0.0), axis=-1, keepdims=True)

    # lane<3 : e/denom ; lane==3 : sigmoid(z) = [z>=0 ? 1 : e] / (1+e), e=exp(-|z|) ; else 0
    numer = jnp.where(is_dir, e,
                      jnp.where(is_conf, jnp.where(z >= 0.0, 1.0, e), 0.0))
    div = jnp.where(is_dir, denom, 1.0 + e)
    res = numer * pl.reciprocal(div, approx=True)                      # ONE full-slab EUP pass

    out_ref[...] = res[:, :OUT_W]                                      # narrow writeback


def _round8(n):
    return max(8, -(-n // 8) * 8)


def _pick_tb(B):
    """Batch tile: tiny batches -> single tile; B>=128 -> even #steps (>=2), tiles <=1024."""
    if B < 128:
        return _round8(B)
    steps = max(2, -(-B // 1024))
    if steps % 2:
        steps += 1
    return _round8(-(-B // steps))


def fuse_params(params):
    """Build the fused/padded weights ONCE (hoist out of the hot path).

    Returns bf16 GEMM weights and f32 biases for the Pallas kernel.
    """
    (w1, b1, w2, b2, w3, b3, cw1, cb1, cw2, cb2) = params
    H = HIDDEN_SIZE       # 128
    Hh = H // 2           # 64
    f32 = jnp.float32

    # Stage A: x -> [h1 (128) | c1 (64) | 0 (64)]
    wa = jnp.zeros((INPUT_SIZE, 2 * H), f32).at[:, :H].set(w1).at[:, H:H + Hh].set(cw1)
    ba = jnp.zeros((1, 2 * H), f32).at[:, :H].set(b1).at[:, H:H + Hh].set(cb1)

    # Stage B: [h1|c1|0] -> [h2 (64) | c1 (64)]
    wb = (jnp.zeros((2 * H, H), f32)
          .at[:H, :Hh].set(w2)
          .at[H:H + Hh, Hh:H].set(jnp.eye(Hh, dtype=f32)))
    bb = jnp.zeros((1, H), f32).at[:, :Hh].set(b2)

    # Stage C: [h2|c1] -> [logits (3) | conf_pre (1) | 0...]
    wc = (jnp.zeros((H, PAD), f32)
          .at[:Hh, :3].set(w3)
          .at[Hh:H, 3:4].set(cw2))
    bc = jnp.zeros((1, PAD), f32).at[:, :3].set(b3).at[:, 3:4].set(cb2)

    bf16 = jnp.bfloat16
    return (wa.astype(bf16), ba, wb.astype(bf16), bb, wc.astype(bf16), bc)


def direction_predictor(x, fused_params):
    """x: (B, INPUT_SIZE) f32. fused_params: output of fuse_params(params).

    Returns (direction_probs (B,3), confidence (B,1)), both f32.
    """
    wa, ba, wb, bb, wc, bc = fused_params
    B, D = x.shape
    assert D == INPUT_SIZE

    TB = _pick_tb(B)
    Bp = -(-B // TB) * TB
    xb = x.astype(jnp.bfloat16)                       # halve the dominant HBM read
    xp = xb if Bp == B else jnp.pad(xb, ((0, Bp - B), (0, 0)))
    grid = (Bp // TB,)

    def const_spec(shape):
        return pl.BlockSpec(shape, lambda i: (0, 0))

    in_specs = [
        pl.BlockSpec((TB, INPUT_SIZE), lambda i: (i, 0)),   # x (batch-tiled)
        const_spec(wa.shape), const_spec(ba.shape),
        const_spec(wb.shape), const_spec(bb.shape),
        const_spec(wc.shape), const_spec(bc.shape),
    ]
    out_specs = pl.BlockSpec((TB, OUT_W), lambda i: (i, 0))
    out_shape = jax.ShapeDtypeStruct((Bp, OUT_W), jnp.float32)

    slab = pl.pallas_call(
        _direction_predictor_kernel,
        grid=grid,
        in_specs=in_specs,
        out_specs=out_specs,
        out_shape=out_shape,
        compiler_params=pltpu.CompilerParams(
            dimension_semantics=("parallel",),
        ),
    )(xp, wa, ba, wb, bb, wc, bc)

    out4 = slab[:B, :4]                               # single slice of the slab
    return out4[:, :3], out4[:, 3:4]


def init_params(key):
    """Deterministic init; Linear weights stored as (in, out), biases as (1, out)."""
    ks = jax.random.split(key, 10)

    def linear(kw, kb, fan_in, fan_out):
        bound = 1.0 / jnp.sqrt(fan_in)
        w = jax.random.uniform(kw, (fan_in, fan_out), jnp.float32, -bound, bound)
        b = jax.random.uniform(kb, (1, fan_out), jnp.float32, -bound, bound)
        return w, b

    w1, b1 = linear(ks[0], ks[1], INPUT_SIZE, HIDDEN_SIZE)           # 256 -> 128
    w2, b2 = linear(ks[2], ks[3], HIDDEN_SIZE, HIDDEN_SIZE // 2)     # 128 -> 64
    w3, b3 = linear(ks[4], ks[5], HIDDEN_SIZE // 2, 3)               # 64  -> 3
    cw1, cb1 = linear(ks[6], ks[7], INPUT_SIZE, HIDDEN_SIZE // 2)    # 256 -> 64
    cw2, cb2 = linear(ks[8], ks[9], HIDDEN_SIZE // 2, 1)             # 64  -> 1
    return (w1, b1, w2, b2, w3, b3, cw1, cb1, cw2, cb2)


def _reference(x, params):
    (w1, b1, w2, b2, w3, b3, cw1, cb1, cw2, cb2) = params
    h = jnp.maximum(x @ w1 + b1, 0.0)
    h = jnp.maximum(h @ w2 + b2, 0.0)
    logits = h @ w3 + b3
    probs = jax.nn.softmax(logits, axis=-1)
    c = jnp.maximum(x @ cw1 + cb1, 0.0)
    conf = jax.nn.sigmoid(c @ cw2 + cb2)
    return probs, conf


if __name__ == "__main__":
    key = jax.random.PRNGKey(0)
    kx, kp, kx2 = jax.random.split(key, 3)
    params = init_params(kp)
    fused = fuse_params(params)     # hoisted: fused/bf16 weights built once

    TOL = 2e-2                      # bf16 matmul operands + approx reciprocal

    # Small batch (exact sublane tile).
    B = 8
    x = jax.random.normal(kx, (B, INPUT_SIZE), jnp.float32)
    probs, conf = direction_predictor(x, fused)
    jax.block_until_ready((probs, conf))

    ref_probs, ref_conf = _reference(x, params)
    assert probs.shape == (B, 3) and conf.shape == (B, 1)
    assert jnp.allclose(probs, ref_probs, atol=TOL, rtol=TOL)
    assert jnp.allclose(conf, ref_conf, atol=TOL, rtol=TOL)
    assert jnp.allclose(jnp.sum(probs, axis=-1), 1.0, atol=1e-2)
    assert bool(jnp.all(conf > 0.0)) and bool(jnp.all(conf < 1.0))

    # Ragged batch (exercises wrapper-side padding).
    B2 = 6
    x2 = jax.random.normal(kx2, (B2, INPUT_SIZE), jnp.float32)
    probs2, conf2 = direction_predictor(x2, fused)
    jax.block_until_ready((probs2, conf2))
    ref_probs2, ref_conf2 = _reference(x2, params)
    assert probs2.shape == (B2, 3) and conf2.shape == (B2, 1)
    assert jnp.allclose(probs2, ref_probs2, atol=TOL, rtol=TOL)
    assert jnp.allclose(conf2, ref_conf2, atol=TOL, rtol=TOL)

    print("KERNEL_OK")
</pallas_src>

<mosaic_0001>
module attributes {stable_mosaic.version = 11 : i64} {
  func.func @_direction_predictor_kernel(%arg0: i32, %arg1: memref<8x256xbf16, #tpu.memory_space<vmem>>, %arg2: memref<256x256xbf16, #tpu.memory_space<vmem>>, %arg3: memref<1x256xf32, #tpu.memory_space<vmem>>, %arg4: memref<256x128xbf16, #tpu.memory_space<vmem>>, %arg5: memref<1x128xf32, #tpu.memory_space<vmem>>, %arg6: memref<128x128xbf16, #tpu.memory_space<vmem>>, %arg7: memref<1x128xf32, #tpu.memory_space<vmem>>, %arg8: memref<8x8xf32, #tpu.memory_space<vmem>>) attributes {dimension_semantics = [#tpu.dimension_semantics<parallel>], iteration_bounds = array<i64: 1>, scalar_prefetch = 0 : i64, scratch_operands = 0 : i64, tpu.core_type = #tpu.core_type<tc>, window_params = [{transform_indices = @transform_0, window_bounds = array<i64: 8, 256>}, {pipeline_mode = #tpu.pipeline_mode<synchronous>, transform_indices = @transform_1, window_bounds = array<i64: 256, 256>}, {pipeline_mode = #tpu.pipeline_mode<synchronous>, transform_indices = @transform_2, window_bounds = array<i64: 1, 256>}, {pipeline_mode = #tpu.pipeline_mode<synchronous>, transform_indices = @transform_3, window_bounds = array<i64: 256, 128>}, {pipeline_mode = #tpu.pipeline_mode<synchronous>, transform_indices = @transform_4, window_bounds = array<i64: 1, 128>}, {pipeline_mode = #tpu.pipeline_mode<synchronous>, transform_indices = @transform_5, window_bounds = array<i64: 128, 128>}, {pipeline_mode = #tpu.pipeline_mode<synchronous>, transform_indices = @transform_6, window_bounds = array<i64: 1, 128>}, {transform_indices = @transform_7, window_bounds = array<i64: 8, 8>}]} {
    %c0 = arith.constant 0 : index
    %c0_0 = arith.constant 0 : index
    %0 = vector.load %arg1[%c0, %c0_0] : memref<8x256xbf16, #tpu.memory_space<vmem>>, vector<8x256xbf16>
    %c0_1 = arith.constant 0 : index
    %c0_2 = arith.constant 0 : index
    %1 = vector.load %arg2[%c0_1, %c0_2] : memref<256x256xbf16, #tpu.memory_space<vmem>>, vector<256x256xbf16>
    %cst = arith.constant dense<0.000000e+00> : vector<8x256xf32>
    %2 = tpu.matmul %0, %1, %cst {dimension_numbers = #tpu.dot_dimension_numbers<[1], [0], [0], [1], [0, 0, 1, 1], [], []>} : vector<8x256xbf16>, vector<256x256xbf16>, vector<8x256xf32> -> vector<8x256xf32>
    %c0_3 = arith.constant 0 : index
    %c0_4 = arith.constant 0 : index
    %3 = vector.load %arg3[%c0_3, %c0_4] : memref<1x256xf32, #tpu.memory_space<vmem>>, vector<1x256xf32>
    %4 = vector.broadcast %3 : vector<1x256xf32> to vector<8x256xf32>
    %5 = arith.addf %2, %4 : vector<8x256xf32>
    %cst_5 = arith.constant 0.000000e+00 : f32
    %6 = vector.broadcast %cst_5 : f32 to vector<8x256xf32>
    %7 = arith.maximumf %5, %6 : vector<8x256xf32>
    %8 = arith.truncf %7 : vector<8x256xf32> to vector<8x256xbf16>
    %c0_6 = arith.constant 0 : index
    %c0_7 = arith.constant 0 : index
    %9 = vector.load %arg4[%c0_6, %c0_7] : memref<256x128xbf16, #tpu.memory_space<vmem>>, vector<256x128xbf16>
    %cst_8 = arith.constant dense<0.000000e+00> : vector<8x128xf32>
    %10 = tpu.matmul %8, %9, %cst_8 {dimension_numbers = #tpu.dot_dimension_numbers<[1], [0], [0], [1], [0, 0, 1, 1], [], []>} : vector<8x256xbf16>, vector<256x128xbf16>, vector<8x128xf32> -> vector<8x128xf32>
    %c0_9 = arith.constant 0 : index
    %c0_10 = arith.constant 0 : index
    %11 = vector.load %arg5[%c0_9, %c0_10] : memref<1x128xf32, #tpu.memory_space<vmem>>, vector<1x128xf32>
    %12 = vector.broadcast %11 : vector<1x128xf32> to vector<8x128xf32>
    %13 = arith.addf %10, %12 : vector<8x128xf32>
    %cst_11 = arith.constant 0.000000e+00 : f32
    %14 = vector.broadcast %cst_11 : f32 to vector<8x128xf32>
    %15 = arith.maximumf %13, %14 : vector<8x128xf32>
    %16 = arith.truncf %15 : vector<8x128xf32> to vector<8x128xbf16>
    %c0_12 = arith.constant 0 : index
    %c0_13 = arith.constant 0 : index
    %17 = vector.load %arg6[%c0_12, %c0_13] : memref<128x128xbf16, #tpu.memory_space<vmem>>, vector<128x128xbf16>
    %cst_14 = arith.constant dense<0.000000e+00> : vector<8x128xf32>
    %18 = tpu.matmul %16, %17, %cst_14 {dimension_numbers = #tpu.dot_dimension_numbers<[1], [0], [0], [1], [0, 0, 1, 1], [], []>} : vector<8x128xbf16>, vector<128x128xbf16>, vector<8x128xf32> -> vector<8x128xf32>
    %c0_15 = arith.constant 0 : index
    %c0_16 = arith.constant 0 : index
    %19 = vector.load %arg7[%c0_15, %c0_16] : memref<1x128xf32, #tpu.memory_space<vmem>>, vector<1x128xf32>
    %20 = vector.broadcast %19 : vector<1x128xf32> to vector<8x128xf32>
    %21 = arith.addf %18, %20 : vector<8x128xf32>
    %22 = tpu.iota {dimensions = array<i32: 1>} : vector<8x128xi32>
    %c3_i32 = arith.constant 3 : i32
    %23 = vector.broadcast %c3_i32 : i32 to vector<8x128xi32>
    %24 = arith.cmpi slt, %22, %23 : vector<8x128xi32>
    %c3_i32_17 = arith.constant 3 : i32
    %25 = vector.broadcast %c3_i32_17 : i32 to vector<8x128xi32>
    %26 = arith.cmpi eq, %22, %25 : vector<8x128xi32>
    %cst_18 = arith.constant -1.000000e+30 : f32
    %27 = vector.broadcast %cst_18 : f32 to vector<8x128xf32>
    %28 = arith.select %24, %21, %27 : vector<8x128xi1>, vector<8x128xf32>
    %cst_19 = arith.constant dense<0xFF800000> : vector<8xf32>
    %29 = vector.multi_reduction <maximumf>, %28, %cst_19 [1] : vector<8x128xf32> to vector<8xf32>
    %30 = vector.shape_cast %29 : vector<8xf32> to vector<8x1xf32>
    %31 = vector.broadcast %30 : vector<8x1xf32> to vector<8x128xf32>
    %32 = arith.subf %21, %31 : vector<8x128xf32>
    %33 = math.absf %21 : vector<8x128xf32>
    %cst_20 = arith.constant 0.000000e+00 : f32
    %34 = vector.broadcast %cst_20 : f32 to vector<8x128xf32>
    %35 = arith.subf %34, %33 : vector<8x128xf32>
    %cst_21 = arith.constant -1.000000e+30 : f32
    %36 = vector.broadcast %cst_21 : f32 to vector<8x128xf32>
    %37 = arith.select %26, %35, %36 : vector<8x128xi1>, vector<8x128xf32>
    %38 = arith.select %24, %32, %37 : vector<8x128xi1>, vector<8x128xf32>
    %39 = math.exp %38 : vector<8x128xf32>
    %cst_22 = arith.constant 0.000000e+00 : f32
    %40 = vector.broadcast %cst_22 : f32 to vector<8x128xf32>
    %41 = arith.select %24, %39, %40 : vector<8x128xi1>, vector<8x128xf32>
    %cst_23 = arith.constant dense<0.000000e+00> : vector<8xf32>
    %42 = vector.multi_reduction <add>, %41, %cst_23 [1] : vector<8x128xf32> to vector<8xf32>
    %43 = vector.shape_cast %42 : vector<8xf32> to vector<8x1xf32>
    %cst_24 = arith.constant 0.000000e+00 : f32
    %44 = vector.broadcast %cst_24 : f32 to vector<8x128xf32>
    %45 = arith.cmpf oge, %21, %44 : vector<8x128xf32>
    %cst_25 = arith.constant 1.000000e+00 : f32
    %46 = vector.broadcast %cst_25 : f32 to vector<8x128xf32>
    %47 = arith.select %45, %46, %39 : vector<8x128xi1>, vector<8x128xf32>
    %cst_26 = arith.constant 0.000000e+00 : f32
    %48 = vector.broadcast %cst_26 : f32 to vector<8x128xf32>
    %49 = arith.select %26, %47, %48 : vector<8x128xi1>, vector<8x128xf32>
    %50 = arith.select %24, %39, %49 : vector<8x128xi1>, vector<8x128xf32>
    %cst_27 = arith.constant 1.000000e+00 : f32
    %51 = vector.broadcast %cst_27 : f32 to vector<8x128xf32>
    %52 = arith.addf %51, %39 : vector<8x128xf32>
    %53 = vector.shape_cast %43 : vector<8x1xf32> to vector<8x1xf32>
    %54 = vector.broadcast %53 : vector<8x1xf32> to vector<8x128xf32>
    %55 = arith.select %24, %54, %52 : vector<8x128xi1>, vector<8x128xf32>
    %56 = tpu.reciprocal %55 {approx = true} : vector<8x128xf32> -> vector<8x128xf32>
    %57 = arith.mulf %50, %56 : vector<8x128xf32>
    %58 = vector.extract_strided_slice %57 {offsets = [0, 0], sizes = [8, 8], strides = [1, 1]} : vector<8x128xf32> to vector<8x8xf32>
    %c0_28 = arith.constant 0 : index
    %c0_29 = arith.constant 0 : index
    %59 = vector.load %arg8[%c0_28, %c0_29] : memref<8x8xf32, #tpu.memory_space<vmem>>, vector<8x8xf32>
    tpu.vector_store %arg8[%c0_28, %c0_29], %58 {strides = array<i32>} : memref<8x8xf32, #tpu.memory_space<vmem>>, vector<8x8xf32>,
    return
  }
  func.func @transform_0(%arg0: i32) -> (i32, i32) {
    %c0_i32 = arith.constant 0 : i32
    %c0_i32_0 = arith.constant 0 : i32
    return %arg0, %c0_i32 : i32, i32
  }
  func.func @transform_1(%arg0: i32) -> (i32, i32) {
    %c0_i32 = arith.constant 0 : i32
    %c0_i32_0 = arith.constant 0 : i32
    %c0_i32_1 = arith.constant 0 : i32
    return %c0_i32, %c0_i32_0 : i32, i32
  }
  func.func @transform_2(%arg0: i32) -> (i32, i32) {
    %c0_i32 = arith.constant 0 : i32
    %c0_i32_0 = arith.constant 0 : i32
    %c0_i32_1 = arith.constant 0 : i32
    return %c0_i32, %c0_i32_0 : i32, i32
  }
  func.func @transform_3(%arg0: i32) -> (i32, i32) {
    %c0_i32 = arith.constant 0 : i32
    %c0_i32_0 = arith.constant 0 : i32
    %c0_i32_1 = arith.constant 0 : i32
    return %c0_i32, %c0_i32_0 : i32, i32
  }
  func.func @transform_4(%arg0: i32) -> (i32, i32) {
    %c0_i32 = arith.constant 0 : i32
    %c0_i32_0 = arith.constant 0 : i32
    %c0_i32_1 = arith.constant 0 : i32
    return %c0_i32, %c0_i32_0 : i32, i32
  }
  func.func @transform_5(%arg0: i32) -> (i32, i32) {
    %c0_i32 = arith.constant 0 : i32
    %c0_i32_0 = arith.constant 0 : i32
    %c0_i32_1 = arith.constant 0 : i32
    return %c0_i32, %c0_i32_0 : i32, i32
  }
  func.func @transform_6(%arg0: i32) -> (i32, i32) {
    %c0_i32 = arith.constant 0 : i32
    %c0_i32_0 = arith.constant 0 : i32
    %c0_i32_1 = arith.constant 0 : i32
    return %c0_i32, %c0_i32_0 : i32, i32
  }
  func.func @transform_7(%arg0: i32) -> (i32, i32) {
    %c0_i32 = arith.constant 0 : i32
    %c0_i32_0 = arith.constant 0 : i32
    return %arg0, %c0_i32 : i32, i32
  }
}

</mosaic_0001>

<llo_original>
// kernel: tpu_custom_call.1
$region0: #{tpu_custom_call.1}
  #allocation0 [shape = 'u32[]', space=smem, size = 0x4, offset = 0x4, fixed_abs, tag = 'smem constant byte address 0x4 - core index']
  #allocation1 [shape = 'u32[144,128]{1,0:T(1,128)}', space=vmem, size = 0x12000, scoped, tag = 'internal scratch']
  %s0 = inlined_call_operand.hbm [shape: bf16[8,256], index: 0, kind: input, shape index: {}]
  %s1 = inlined_call_operand.hbm [shape: bf16[256,256], index: 1, kind: input, shape index: {}]
  %s2 = inlined_call_operand.vmem [shape: f32[1,256], index: 2, kind: input, shape index: {}]
  %s3 = inlined_call_operand.hbm [shape: bf16[256,128], index: 3, kind: input, shape index: {}]
  %s4 = inlined_call_operand.vmem [shape: f32[1,128], index: 4, kind: input, shape index: {}]
  %s5 = inlined_call_operand.hbm [shape: bf16[128,128], index: 5, kind: input, shape index: {}]
  %s6 = inlined_call_operand.vmem [shape: f32[1,128], index: 6, kind: input, shape index: {}]
  %s7 = inlined_call_operand.hbm [shape: f32[8,8], index: 7, kind: output, shape index: {}]
  %s8 = sld [smem:[#allocation0]]
  $region54: #{tpu_custom_call.1} parent=0
    _
  %s10 = ssub.s32 1, %s8
  %s11 = scalar_select 0, %s10, %s8
  $region1: #{tpu_custom_call.1} parent=0
    #allocation2 [shape = 'u8[4096]{0}', space=vmem, size = 0x1000, scoped, tag = 'input window, operand 0, single buffered']
    #allocation3 [shape = 's32[1]{0}', space=sflag, size = 0x4, scoped, tag = 'scoped memory for tpu_custom_call.1']
    #allocation4 [shape = 's32[1]{0}', space=sflag, size = 0x4, scoped, tag = 'scoped memory for tpu_custom_call.1']
    #allocation5 [shape = 'u8[131072]{0}', space=vmem, size = 0x20000, scoped, tag = 'input window, operand 1, single buffered']
    #allocation6 [shape = 's32[1]{0}', space=sflag, size = 0x4, scoped, tag = 'scoped memory for tpu_custom_call.1']
    #allocation7 [shape = 'u8[65536]{0}', space=vmem, size = 0x10000, scoped, tag = 'input window, operand 3, single buffered']
    #allocation8 [shape = 'u8[32768]{0}', space=vmem, size = 0x8000, scoped, tag = 'input window, operand 5, single buffered']
    #allocation9 [shape = 's32[1]{0}', space=sflag, size = 0x4, scoped, tag = 'scoped memory for tpu_custom_call.1']
    #allocation10 [shape = 'u8[4096]{0}', space=vmem, size = 0x1000, scoped, tag = 'output window, operand 0, single buffered']
    %12 = vsyncpa [#allocation3], 0
    %13 = vsyncpa [#allocation6], 0
    %14 = vsyncpa [#allocation9], 0
    %15 = vsyncpa [#allocation4], 0
    // Predicated region
    $region2: #{tpu_custom_call.1} parent=1 // pred_check
      _
    $region3: #{tpu_custom_call.1} parent=1 // pred_check_branch
      %17 = sbr.rel (0) target = $region5
    $region4: #{tpu_custom_call.1} parent=1 // pred_region
      %s19 = ssub.s32 128, 128
      %20 = vsyncadd [#allocation3], %s19
      %s22 = sshll.u32 [#allocation2], 4
      %s23 = int_to_ptr.vmem [resolvable:$true] %s22
      %25 = dma.hbm_to_vmem [thread:$0]  %s0, 128, %s23, [#allocation3]
    $region5: #{tpu_custom_call.1} parent=1 // pred_fallthru
      _
    // Predicated region
    $region6: #{tpu_custom_call.1} parent=1 // pred_check
      _
    $region7: #{tpu_custom_call.1} parent=1 // pred_check_branch
      %27 = sbr.rel (0) target = $region9
    $region8: #{tpu_custom_call.1} parent=1 // pred_region
      %s29 = ssub.s32 4096, 4096
      %30 = vsyncadd [#allocation6], %s29
      %s31 = sshll.u32 [#allocation5], 4
      %s32 = int_to_ptr.vmem [resolvable:$true] %s31
      %37 = dma.hbm_to_vmem [thread:$0]  %s1, 4096, %s32, [#allocation6], 128, 128, 8
    $region9: #{tpu_custom_call.1} parent=1 // pred_fallthru
      _
    // Predicated region
    $region10: #{tpu_custom_call.1} parent=1 // pred_check
      _
    $region11: #{tpu_custom_call.1} parent=1 // pred_check_branch
      %39 = sbr.rel (0) target = $region13
    $region12: #{tpu_custom_call.1} parent=1 // pred_region
      _
    $region13: #{tpu_custom_call.1} parent=1 // pred_fallthru
      _
    // Predicated region
    $region14: #{tpu_custom_call.1} parent=1 // pred_check
      _
    $region15: #{tpu_custom_call.1} parent=1 // pred_check_branch
      %41 = sbr.rel (0) target = $region17
    $region16: #{tpu_custom_call.1} parent=1 // pred_region
      %s43 = ssub.s32 2048, 2048
      %44 = vsyncadd [#allocation6], %s43
      %s45 = sshll.u32 [#allocation7], 4
      %s46 = int_to_ptr.vmem [resolvable:$true] %s45
      %51 = dma.hbm_to_vmem [thread:$0]  %s3, 2048, %s46, [#allocation6], 64, 64, 4
    $region17: #{tpu_custom_call.1} parent=1 // pred_fallthru
      _
    // Predicated region
    $region18: #{tpu_custom_call.1} parent=1 // pred_check
      _
    $region19: #{tpu_custom_call.1} parent=1 // pred_check_branch
      %53 = sbr.rel (0) target = $region21
    $region20: #{tpu_custom_call.1} parent=1 // pred_region
      _
    $region21: #{tpu_custom_call.1} parent=1 // pred_fallthru
      _
    // Predicated region
    $region22: #{tpu_custom_call.1} parent=1 // pred_check
      _
    $region23: #{tpu_custom_call.1} parent=1 // pred_check_branch
      %55 = sbr.rel (0) target = $region25
    $region24: #{tpu_custom_call.1} parent=1 // pred_region
      %s57 = ssub.s32 1024, 1024
      %58 = vsyncadd [#allocation9], %s57
      %s59 = sshll.u32 [#allocation8], 4
      %s60 = int_to_ptr.vmem [resolvable:$true] %s59
      %65 = dma.hbm_to_vmem [thread:$0]  %s5, 1024, %s60, [#allocation9], 64, 64, 4
    $region25: #{tpu_custom_call.1} parent=1 // pred_fallthru
      _
    // Predicated region
    $region26: #{tpu_custom_call.1} parent=1 // pred_check
      _
    $region27: #{tpu_custom_call.1} parent=1 // pred_check_branch
      %67 = sbr.rel (0) target = $region29
    $region28: #{tpu_custom_call.1} parent=1 // pred_region
      _
    $region29: #{tpu_custom_call.1} parent=1 // pred_fallthru
      _
    // Predicated region
    $region30: #{tpu_custom_call.1} parent=1 // pred_check
      _
    $region31: #{tpu_custom_call.1} parent=1 // pred_check_branch
      %69 = sbr.rel (0) target = $region33
    $region32: #{tpu_custom_call.1} parent=1 // pred_region
      %70 = dma.done [#allocation3], 128
    $region33: #{tpu_custom_call.1} parent=1 // pred_fallthru
      _
    // Predicated region
    $region34: #{tpu_custom_call.1} parent=1 // pred_check
      _
    $region35: #{tpu_custom_call.1} parent=1 // pred_check_branch
      %72 = sbr.rel (0) target = $region37
    $region36: #{tpu_custom_call.1} parent=1 // pred_region
      %73 = dma.done [#allocation6], 4096
    $region37: #{tpu_custom_call.1} parent=1 // pred_fallthru
      _
    // Predicated region
    $region38: #{tpu_custom_call.1} parent=1 // pred_check
      _
    $region39: #{tpu_custom_call.1} parent=1 // pred_check_branch
      %75 = sbr.rel (0) target = $region41
    $region40: #{tpu_custom_call.1} parent=1 // pred_region
      %76 = dma.done [#allocation6], 2048
    $region41: #{tpu_custom_call.1} parent=1 // pred_fallthru
      _
    // Predicated region
    $region42: #{tpu_custom_call.1} parent=1 // pred_check
      _
    $region43: #{tpu_custom_call.1} parent=1 // pred_check_branch
      %78 = sbr.rel (0) target = $region45
    $region44: #{tpu_custom_call.1} parent=1 // pred_region
      %79 = dma.done [#allocation9], 1024
    $region45: #{tpu_custom_call.1} parent=1 // pred_fallthru
      _
    %v81 = vld [vmem:[#allocation2] sm:$0xff]
    %v82 = vld [vmem:[#allocation5] sm:$0xff]
    %v83 = vld [vmem:[#allocation5 + $0x8] sm:$0xff]
    %v84 = vld [vmem:[#allocation5 + $0x10] sm:$0xff]
    %v85 = vld [vmem:[#allocation5 + $0x18] sm:$0xff]
    %v86 = vld [vmem:[#allocation5 + $0x20] sm:$0xff]
    %v87 = vld [vmem:[#allocation5 + $0x28] sm:$0xff]
    %v88 = vld [vmem:[#allocation5 + $0x30] sm:$0xff]
    %v89 = vld [vmem:[#allocation5 + $0x38] sm:$0xff]
    %v90 = vld [vmem:[#allocation5 + $0x40] sm:$0xff]
    %v91 = vld [vmem:[#allocation5 + $0x48] sm:$0xff]
    %v92 = vld [vmem:[#allocation5 + $0x50] sm:$0xff]
    %v93 = vld [vmem:[#allocation5 + $0x58] sm:$0xff]
    %v94 = vld [vmem:[#allocation5 + $0x60] sm:$0xff]
    %v95 = vld [vmem:[#allocation5 + $0x68] sm:$0xff]
    %v96 = vld [vmem:[#allocation5 + $0x70] sm:$0xff]
    %v97 = vld [vmem:[#allocation5 + $0x78] sm:$0xff]
    %v98 = vld [vmem:[#allocation5 + $0x80] sm:$0xff]
    %v99 = vld [vmem:[#allocation5 + $0x88] sm:$0xff]
    %v100 = vld [vmem:[#allocation5 + $0x90] sm:$0xff]
    %v101 = vld [vmem:[#allocation5 + $0x98] sm:$0xff]
    %v102 = vld [vmem:[#allocation5 + $0xa0] sm:$0xff]
    %v103 = vld [vmem:[#allocation5 + $0xa8] sm:$0xff]
    %v104 = vld [vmem:[#allocation5 + $0xb0] sm:$0xff]
    %v105 = vld [vmem:[#allocation5 + $0xb8] sm:$0xff]
    %v106 = vld [vmem:[#allocation5 + $0xc0] sm:$0xff]
    %v107 = vld [vmem:[#allocation5 + $0xc8] sm:$0xff]
    %v108 = vld [vmem:[#allocation5 + $0xd0] sm:$0xff]
    %v109 = vld [vmem:[#allocation5 + $0xd8] sm:$0xff]
    %v110 = vld [vmem:[#allocation5 + $0xe0] sm:$0xff]
    %v111 = vld [vmem:[#allocation5 + $0xe8] sm:$0xff]
    %v112 = vld [vmem:[#allocation5 + $0xf0] sm:$0xff]
    %v113 = vld [vmem:[#allocation5 + $0xf8] sm:$0xff]
    %v114 = vld [vmem:[%s2] sm:$0x3]
    %v116 = vlaneseq
    %v117 = vshrl.u32 %v116, 7
    %v118 = vsub.s32 0, %v117
    %v119 = vrot.slane %v114, %v118
    %v120 = vlaneseq
    %v121 = vshrl.u32 %v120, 7
    %v122 = vsub.s32 1, %v121
    %v123 = vrot.slane %v114, %v122
    %v127 = vunpack.c.l.b16 %v81
    %v128 = vunpack.c.h.b16 %v81
    %v129 = vpack.c.b16 %v127, %v127
    %v130 = vpack.c.b16 %v128, %v128
    %v165 = vunpack.c.l.b16 %v82
    %v166 = vunpack.c.h.b16 %v82
    %v167 = vunpack.c.l.b16 %v83
    %v168 = vunpack.c.h.b16 %v83
    %v169 = vunpack.c.l.b16 %v84
    %v170 = vunpack.c.h.b16 %v84
    %v171 = vunpack.c.l.b16 %v85
    %v172 = vunpack.c.h.b16 %v85
    %v173 = vunpack.c.l.b16 %v86
    %v174 = vunpack.c.h.b16 %v86
    %v175 = vunpack.c.l.b16 %v87
    %v176 = vunpack.c.h.b16 %v87
    %v177 = vunpack.c.l.b16 %v88
    %v178 = vunpack.c.h.b16 %v88
    %v179 = vunpack.c.l.b16 %v89
    %v180 = vunpack.c.h.b16 %v89
    %v181 = vunpack.c.l.b16 %v90
    %v182 = vunpack.c.h.b16 %v90
    %v183 = vunpack.c.l.b16 %v91
    %v184 = vunpack.c.h.b16 %v91
    %v185 = vunpack.c.l.b16 %v92
    %v186 = vunpack.c.h.b16 %v92
    %v187 = vunpack.c.l.b16 %v93
    %v188 = vunpack.c.h.b16 %v93
    %v189 = vunpack.c.l.b16 %v94
    %v190 = vunpack.c.h.b16 %v94
    %v191 = vunpack.c.l.b16 %v95
    %v192 = vunpack.c.h.b16 %v95
    %v193 = vunpack.c.l.b16 %v96
    %v194 = vunpack.c.h.b16 %v96
    %v195 = vunpack.c.l.b16 %v97
    %v196 = vunpack.c.h.b16 %v97
    %v197 = vunpack.c.l.b16 %v98
    %v198 = vunpack.c.h.b16 %v98
    %v199 = vunpack.c.l.b16 %v99
    %v200 = vunpack.c.h.b16 %v99
    %v201 = vunpack.c.l.b16 %v100
    %v202 = vunpack.c.h.b16 %v100
    %v203 = vunpack.c.l.b16 %v101
    %v204 = vunpack.c.h.b16 %v101
    %v205 = vunpack.c.l.b16 %v102
    %v206 = vunpack.c.h.b16 %v102
    %v207 = vunpack.c.l.b16 %v103
    %v208 = vunpack.c.h.b16 %v103
    %v209 = vunpack.c.l.b16 %v104
    %v210 = vunpack.c.h.b16 %v104
    %v211 = vunpack.c.l.b16 %v105
    %v212 = vunpack.c.h.b16 %v105
    %v213 = vunpack.c.l.b16 %v106
    %v214 = vunpack.c.h.b16 %v106
    %v215 = vunpack.c.l.b16 %v107
    %v216 = vunpack.c.h.b16 %v107
    %v217 = vunpack.c.l.b16 %v108
    %v218 = vunpack.c.h.b16 %v108
    %v219 = vunpack.c.l.b16 %v109
    %v220 = vunpack.c.h.b16 %v109
    %v221 = vunpack.c.l.b16 %v110
    %v222 = vunpack.c.h.b16 %v110
    %v223 = vunpack.c.l.b16 %v111
    %v224 = vunpack.c.h.b16 %v111
    %v225 = vunpack.c.l.b16 %v112
    %v226 = vunpack.c.h.b16 %v112
    %v227 = vunpack.c.l.b16 %v113
    %v228 = vunpack.c.h.b16 %v113
    %v229 = vpack.c.b16 %v167, %v165
    %v230 = vpack.c.b16 %v168, %v166
    %v231 = vpack.c.b16 %v171, %v169
    %v232 = vpack.c.b16 %v172, %v170
    %v233 = vpack.c.b16 %v175, %v173
    %v234 = vpack.c.b16 %v176, %v174
    %v235 = vpack.c.b16 %v179, %v177
    %v236 = vpack.c.b16 %v180, %v178
    %v237 = vpack.c.b16 %v183, %v181
    %v238 = vpack.c.b16 %v184, %v182
    %v239 = vpack.c.b16 %v187, %v185
    %v240 = vpack.c.b16 %v188, %v186
    %v241 = vpack.c.b16 %v191, %v189
    %v242 = vpack.c.b16 %v192, %v190
    %v243 = vpack.c.b16 %v195, %v193
    %v244 = vpack.c.b16 %v196, %v194
    %v245 = vpack.c.b16 %v199, %v197
    %v246 = vpack.c.b16 %v200, %v198
    %v247 = vpack.c.b16 %v203, %v201
    %v248 = vpack.c.b16 %v204, %v202
    %v249 = vpack.c.b16 %v207, %v205
    %v250 = vpack.c.b16 %v208, %v206
    %v251 = vpack.c.b16 %v211, %v209
    %v252 = vpack.c.b16 %v212, %v210
    %v253 = vpack.c.b16 %v215, %v213
    %v254 = vpack.c.b16 %v216, %v214
    %v255 = vpack.c.b16 %v219, %v217
    %v256 = vpack.c.b16 %v220, %v218
    %v257 = vpack.c.b16 %v223, %v221
    %v258 = vpack.c.b16 %v224, %v222
    %v259 = vpack.c.b16 %v227, %v225
    %v260 = vpack.c.b16 %v228, %v226
    %293 = vmatprep.subr.bf16.mxu0 %v244
    %294 = vmatpush1.bf16.msra.mxu0 %v243
    %295 = vmatprep.subr.bf16.mxu0 %v242
    %296 = vmatpush1.bf16.msra.mxu0 %v241
    %297 = vmatprep.subr.bf16.mxu0 %v240
    %298 = vmatpush1.bf16.msra.mxu0 %v239
    %299 = vmatprep.subr.bf16.mxu0 %v238
    %300 = vmatpush1.bf16.msra.mxu0 %v237
    %301 = vmatprep.subr.bf16.mxu0 %v236
    %302 = vmatpush1.bf16.msra.mxu0 %v235
    %303 = vmatprep.subr.bf16.mxu0 %v234
    %304 = vmatpush1.bf16.msra.mxu0 %v233
    %305 = vmatprep.subr.bf16.mxu0 %v232
    %306 = vmatpush1.bf16.msra.mxu0 %v231
    %307 = vmatprep.subr.bf16.mxu0 %v230
    %308 = vmatpush1.bf16.msra.mxu0 %v229
    %309 = vmatprep.subr.bf16.mxu0 %v260
    %310 = vmatpush2.bf16.msra.mxu0 %v259
    %311 = vmatprep.subr.bf16.mxu0 %v258
    %312 = vmatpush2.bf16.msra.mxu0 %v257
    %313 = vmatprep.subr.bf16.mxu0 %v256
    %314 = vmatpush2.bf16.msra.mxu0 %v255
    %315 = vmatprep.subr.bf16.mxu0 %v254
    %316 = vmatpush2.bf16.msra.mxu0 %v253
    %317 = vmatprep.subr.bf16.mxu0 %v252
    %318 = vmatpush2.bf16.msra.mxu0 %v251
    %319 = vmatprep.subr.bf16.mxu0 %v250
    %320 = vmatpush2.bf16.msra.mxu0 %v249
    %321 = vmatprep.subr.bf16.mxu0 %v248
    %322 = vmatpush2.bf16.msra.mxu0 %v247
    %323 = vmatprep.subr.bf16.mxu0 %v246
    %324 = vmatpush2.bf16.msra.mxu0 %v245
    %325 = vmatprep.mubr.bf16.mxu0 %v130
    %326 = vmatmul.mubr.bf16.gmra.mxu0 %v129
    %v327 = vpop.f32.mrf.mxu0
    %v328 = vadd.f32 %v119, %v327
    %v329 = vpop.f32.mrf.mxu0
    %v330 = vadd.f32 %v123, %v329
    %v331 = vpop.f32.mrf.mxu0
    %v332 = vpop.f32.mrf.mxu0
    %333 = vdwg.mxu0
    %v334 = vmax.f32 %v328, 0.0
    %v335 = vmax.f32 %v330, 0.0
    %v336 = vpack.c.bf16 %v334, %v334
    %v337 = vpack.c.bf16 %v335, %v335
    %v338 = vld [vmem:[#allocation7] sm:$0xf]
    %v339 = vld [vmem:[#allocation7 + $0x4] sm:$0xf]
    %v340 = vld [vmem:[#allocation7 + $0x8] sm:$0xf]
    %v341 = vld [vmem:[#allocation7 + $0xc] sm:$0xf]
    %v342 = vld [vmem:[#allocation7 + $0x10] sm:$0xf]
    %v343 = vld [vmem:[#allocation7 + $0x14] sm:$0xf]
    %v344 = vld [vmem:[#allocation7 + $0x18] sm:$0xf]
    %v345 = vld [vmem:[#allocation7 + $0x1c] sm:$0xf]
    %v346 = vld [vmem:[#allocation7 + $0x20] sm:$0xf]
    %v347 = vld [vmem:[#allocation7 + $0x24] sm:$0xf]
    %v348 = vld [vmem:[#allocation7 + $0x28] sm:$0xf]
    %v349 = vld [vmem:[#allocation7 + $0x2c] sm:$0xf]
    %v350 = vld [vmem:[#allocation7 + $0x30] sm:$0xf]
    %v351 = vld [vmem:[#allocation7 + $0x34] sm:$0xf]
    %v352 = vld [vmem:[#allocation7 + $0x38] sm:$0xf]
    %v353 = vld [vmem:[#allocation7 + $0x3c] sm:$0xf]
    %v354 = vld [vmem:[#allocation7 + $0x40] sm:$0xf]
    %v355 = vld [vmem:[#allocation7 + $0x44] sm:$0xf]
    %v356 = vld [vmem:[#allocation7 + $0x48] sm:$0xf]
    %v357 = vld [vmem:[#allocation7 + $0x4c] sm:$0xf]
    %v358 = vld [vmem:[#allocation7 + $0x50] sm:$0xf]
    %v359 = vld [vmem:[#allocation7 + $0x54] sm:$0xf]
    %v360 = vld [vmem:[#allocation7 + $0x58] sm:$0xf]
    %v361 = vld [vmem:[#allocation7 + $0x5c] sm:$0xf]
    %v362 = vld [vmem:[#allocation7 + $0x60] sm:$0xf]
    %v363 = vld [vmem:[#allocation7 + $0x64] sm:$0xf]
    %v364 = vld [vmem:[#allocation7 + $0x68] sm:$0xf]
    %v365 = vld [vmem:[#allocation7 + $0x6c] sm:$0xf]
    %v366 = vld [vmem:[#allocation7 + $0x70] sm:$0xf]
    %v367 = vld [vmem:[#allocation7 + $0x74] sm:$0xf]
    %v368 = vld [vmem:[#allocation7 + $0x78] sm:$0xf]
    %v369 = vld [vmem:[#allocation7 + $0x7c] sm:$0xf]
    %v370 = vld [vmem:[%s4] sm:$0x1]
    %v372 = vlaneseq
    %v373 = vshrl.u32 %v372, 7
    %v374 = vsub.s32 0, %v373
    %v375 = vrot.slane %v370, %v374
    %v409 = vunpack.c.l.b16 %v338
    %v410 = vunpack.c.l.b16 %v339
    %v411 = vunpack.c.l.b16 %v340
    %v412 = vunpack.c.l.b16 %v341
    %v413 = vunpack.c.l.b16 %v342
    %v414 = vunpack.c.l.b16 %v343
    %v415 = vunpack.c.l.b16 %v344
    %v416 = vunpack.c.l.b16 %v345
    %v417 = vunpack.c.l.b16 %v346
    %v418 = vunpack.c.l.b16 %v347
    %v419 = vunpack.c.l.b16 %v348
    %v420 = vunpack.c.l.b16 %v349
    %v421 = vunpack.c.l.b16 %v350
    %v422 = vunpack.c.l.b16 %v351
    %v423 = vunpack.c.l.b16 %v352
    %v424 = vunpack.c.l.b16 %v353
    %v425 = vunpack.c.l.b16 %v354
    %v426 = vunpack.c.l.b16 %v355
    %v427 = vunpack.c.l.b16 %v356
    %v428 = vunpack.c.l.b16 %v357
    %v429 = vunpack.c.l.b16 %v358
    %v430 = vunpack.c.l.b16 %v359
    %v431 = vunpack.c.l.b16 %v360
    %v432 = vunpack.c.l.b16 %v361
    %v433 = vunpack.c.l.b16 %v362
    %v434 = vunpack.c.l.b16 %v363
    %v435 = vunpack.c.l.b16 %v364
    %v436 = vunpack.c.l.b16 %v365
    %v437 = vunpack.c.l.b16 %v366
    %v438 = vunpack.c.l.b16 %v367
    %v439 = vunpack.c.l.b16 %v368
    %v440 = vunpack.c.l.b16 %v369
    %v441 = vpack.c.b16 %v410, %v409
    %v442 = vpack.c.b16 %v412, %v411
    %v443 = vpack.c.b16 %v414, %v413
    %v444 = vpack.c.b16 %v416, %v415
    %v445 = vpack.c.b16 %v418, %v417
    %v446 = vpack.c.b16 %v420, %v419
    %v447 = vpack.c.b16 %v422, %v421
    %v448 = vpack.c.b16 %v424, %v423
    %v449 = vpack.c.b16 %v426, %v425
    %v450 = vpack.c.b16 %v428, %v427
    %v451 = vpack.c.b16 %v430, %v429
    %v452 = vpack.c.b16 %v432, %v431
    %v453 = vpack.c.b16 %v434, %v433
    %v454 = vpack.c.b16 %v436, %v435
    %v455 = vpack.c.b16 %v438, %v437
    %v456 = vpack.c.b16 %v440, %v439
    %473 = vmatprep.subr.bf16.mxu0 0
    %474 = vmatpush1.bf16.msra.mxu0 %v448
    %475 = vmatprep.subr.bf16.mxu0 0
    %476 = vmatpush1.bf16.msra.mxu0 %v447
    %477 = vmatprep.subr.bf16.mxu0 0
    %478 = vmatpush1.bf16.msra.mxu0 %v446
    %479 = vmatprep.subr.bf16.mxu0 0
    %480 = vmatpush1.bf16.msra.mxu0 %v445
    %481 = vmatprep.subr.bf16.mxu0 0
    %482 = vmatpush1.bf16.msra.mxu0 %v444
    %483 = vmatprep.subr.bf16.mxu0 0
    %484 = vmatpush1.bf16.msra.mxu0 %v443
    %485 = vmatprep.subr.bf16.mxu0 0
    %486 = vmatpush1.bf16.msra.mxu0 %v442
    %487 = vmatprep.subr.bf16.mxu0 0
    %488 = vmatpush1.bf16.msra.mxu0 %v441
    %489 = vmatprep.subr.bf16.mxu0 0
    %490 = vmatpush2.bf16.msra.mxu0 %v456
    %491 = vmatprep.subr.bf16.mxu0 0
    %492 = vmatpush2.bf16.msra.mxu0 %v455
    %493 = vmatprep.subr.bf16.mxu0 0
    %494 = vmatpush2.bf16.msra.mxu0 %v454
    %495 = vmatprep.subr.bf16.mxu0 0
    %496 = vmatpush2.bf16.msra.mxu0 %v453
    %497 = vmatprep.subr.bf16.mxu0 0
    %498 = vmatpush2.bf16.msra.mxu0 %v452
    %499 = vmatprep.subr.bf16.mxu0 0
    %500 = vmatpush2.bf16.msra.mxu0 %v451
    %501 = vmatprep.subr.bf16.mxu0 0
    %502 = vmatpush2.bf16.msra.mxu0 %v450
    %503 = vmatprep.subr.bf16.mxu0 0
    %504 = vmatpush2.bf16.msra.mxu0 %v449
    %505 = vmatprep.mubr.bf16.mxu0 %v337
    %506 = vmatmul.mubr.bf16.gmra.mxu0 %v336
    %v507 = vpop.f32.mrf.mxu0
    %v508 = vadd.f32 %v375, %v507
    %v509 = vpop.f32.mrf.mxu0
    %v510 = vpop.f32.mrf.mxu0
    %v511 = vpop.f32.mrf.mxu0
    %512 = vdwg.mxu0
    %v513 = vmax.f32 %v508, 0.0
    %v514 = vpack.c.bf16 %v513, %v513
    %v515 = vld [vmem:[#allocation8] sm:$0xf]
    %v516 = vld [vmem:[#allocation8 + $0x4] sm:$0xf]
    %v517 = vld [vmem:[#allocation8 + $0x8] sm:$0xf]
    %v518 = vld [vmem:[#allocation8 + $0xc] sm:$0xf]
    %v519 = vld [vmem:[#allocation8 + $0x10] sm:$0xf]
    %v520 = vld [vmem:[#allocation8 + $0x14] sm:$0xf]
    %v521 = vld [vmem:[#allocation8 + $0x18] sm:$0xf]
    %v522 = vld [vmem:[#allocation8 + $0x1c] sm:$0xf]
    %v523 = vld [vmem:[#allocation8 + $0x20] sm:$0xf]
    %v524 = vld [vmem:[#allocation8 + $0x24] sm:$0xf]
    %v525 = vld [vmem:[#allocation8 + $0x28] sm:$0xf]
    %v526 = vld [vmem:[#allocation8 + $0x2c] sm:$0xf]
    %v527 = vld [vmem:[#allocation8 + $0x30] sm:$0xf]
    %v528 = vld [vmem:[#allocation8 + $0x34] sm:$0xf]
    %v529 = vld [vmem:[#allocation8 + $0x38] sm:$0xf]
    %v530 = vld [vmem:[#allocation8 + $0x3c] sm:$0xf]
    %v531 = vld [vmem:[%s6] sm:$0x1]
    %v533 = vlaneseq
    %v534 = vshrl.u32 %v533, 7
    %v535 = vsub.s32 0, %v534
    %v536 = vrot.slane %v531, %v535
    %v554 = vunpack.c.l.b16 %v515
    %v555 = vunpack.c.l.b16 %v516
    %v556 = vunpack.c.l.b16 %v517
    %v557 = vunpack.c.l.b16 %v518
    %v558 = vunpack.c.l.b16 %v519
    %v559 = vunpack.c.l.b16 %v520
    %v560 = vunpack.c.l.b16 %v521
    %v561 = vunpack.c.l.b16 %v522
    %v562 = vunpack.c.l.b16 %v523
    %v563 = vunpack.c.l.b16 %v524
    %v564 = vunpack.c.l.b16 %v525
    %v565 = vunpack.c.l.b16 %v526
    %v566 = vunpack.c.l.b16 %v527
    %v567 = vunpack.c.l.b16 %v528
    %v568 = vunpack.c.l.b16 %v529
    %v569 = vunpack.c.l.b16 %v530
    %v570 = vpack.c.b16 %v555, %v554
    %v571 = vpack.c.b16 %v557, %v556
    %v572 = vpack.c.b16 %v559, %v558
    %v573 = vpack.c.b16 %v561, %v560
    %v574 = vpack.c.b16 %v563, %v562
    %v575 = vpack.c.b16 %v565, %v564
    %v576 = vpack.c.b16 %v567, %v566
    %v577 = vpack.c.b16 %v569, %v568
    %586 = vmatprep.subr.bf16.mxu0 0
    %587 = vmatpush1.bf16.msra.mxu0 %v577
    %588 = vmatprep.subr.bf16.mxu0 0
    %589 = vmatpush1.bf16.msra.mxu0 %v576
    %590 = vmatprep.subr.bf16.mxu0 0
    %591 = vmatpush1.bf16.msra.mxu0 %v575
    %592 = vmatprep.subr.bf16.mxu0 0
    %593 = vmatpush1.bf16.msra.mxu0 %v574
    %594 = vmatprep.subr.bf16.mxu0 0
    %595 = vmatpush1.bf16.msra.mxu0 %v573
    %596 = vmatprep.subr.bf16.mxu0 0
    %597 = vmatpush1.bf16.msra.mxu0 %v572
    %598 = vmatprep.subr.bf16.mxu0 0
    %599 = vmatpush1.bf16.msra.mxu0 %v571
    %600 = vmatprep.subr.bf16.mxu0 0
    %601 = vmatpush1.bf16.msra.mxu0 %v570
    %602 = vmatprep.subr.bf16.mxu0 0
    %603 = vmatpush2.bf16.msra.mxu0 0
    %604 = vmatprep.subr.bf16.mxu0 0
    %605 = vmatpush2.bf16.msra.mxu0 0
    %606 = vmatprep.subr.bf16.mxu0 0
    %607 = vmatpush2.bf16.msra.mxu0 0
    %608 = vmatprep.subr.bf16.mxu0 0
    %609 = vmatpush2.bf16.msra.mxu0 0
    %610 = vmatprep.subr.bf16.mxu0 0
    %611 = vmatpush2.bf16.msra.mxu0 0
    %612 = vmatprep.subr.bf16.mxu0 0
    %613 = vmatpush2.bf16.msra.mxu0 0
    %614 = vmatprep.subr.bf16.mxu0 0
    %615 = vmatpush2.bf16.msra.mxu0 0
    %616 = vmatprep.subr.bf16.mxu0 0
    %617 = vmatpush2.bf16.msra.mxu0 0
    %618 = vmatprep.mubr.bf16.mxu0 0
    %619 = vmatmul.mubr.bf16.gmra.mxu0 %v514
    %v620 = vpop.f32.mrf.mxu0
    %v621 = vadd.f32 %v536, %v620
    %v622 = vpop.f32.mrf.mxu0
    %v623 = vpop.f32.mrf.mxu0
    %v624 = vpop.f32.mrf.mxu0
    %625 = vdwg.mxu0
    %v626 = vlaneseq
    %v627 = vand.u32 %v626, 127
    %vm628 = vcmp.lt.s32.totalorder %v627, 3
    %vm629 = vcmp.eq.s32.totalorder %v627, 3
    %v630 = vsel %vm628, %v621, -1e+30
    %631 = vmax.xlane.f32.xlu0 %v630
    %v632 = vpop.xlane.xlu0 %631
    %v633 = vsub.f32 %v621, %v632
    %v634 = vand.u32 2147483647, %v621
    %v635 = vsub.f32 0.0, %v634
    %v636 = vsel %vm629, %v635, -1e+30
    %v637 = vsel %vm628, %v633, %v636
    %v638 = vmul.f32 %v637, 1.442695
    %v639 = vpow.pop %v638
    %v640 = vsel %vm628, %v639, 0.0
    %641 = vadd.xlane.f32.xlu0 %v640
    %v642 = vpop.xlane.xlu0 %641
    %vm643 = vcmp.ge.f32.partialorder %v621, 0.0
    %v644 = vsel %vm643, 1.0, %v639
    %v645 = vsel %vm629, %v644, 0.0
    %v646 = vsel %vm628, %v639, %v645
    %v647 = vadd.f32 %v639, 1.0
    %v648 = vsel %vm628, %v642, %v647
    %v649 = vrcp.pop %v648
    %v650 = vmul.f32 %v646, %v649
    %vm651 = vcmask 64512
    %652 = vst.msk [vmem:[#allocation10] sm:$0xff] %vm651, %v650
    // Predicated region
    $region46: #{tpu_custom_call.1} parent=1 // pred_check
      _
    $region47: #{tpu_custom_call.1} parent=1 // pred_check_branch
      %654 = sbr.rel (0) target = $region49
    $region48: #{tpu_custom_call.1} parent=1 // pred_region
      %s656 = ssub.s32 128, 128
      %657 = vsyncadd [#allocation4], %s656
      %s659 = sshll.u32 [#allocation10], 4
      %s660 = int_to_ptr.vmem [resolvable:$true] %s659
      %662 = dma.vmem_to_hbm [thread:$0]  %s660, 128, %s7, [#allocation4]
    $region49: #{tpu_custom_call.1} parent=1 // pred_fallthru
      _
    // Predicated region
    $region50: #{tpu_custom_call.1} parent=1 // pred_check
      _
    $region51: #{tpu_custom_call.1} parent=1 // pred_check_branch
      %664 = sbr.rel (0) target = $region53
    $region52: #{tpu_custom_call.1} parent=1 // pred_region
      %665 = dma.done [#allocation4], 128
    $region53: #{tpu_custom_call.1} parent=1 // pred_fallthru
      _
    %666 = vsyncpa [#allocation3], 1
    %667 = vsyncpa [#allocation6], 1
    %668 = vsyncpa [#allocation9], 1
    %669 = vsyncpa [#allocation4], 1

</llo_original>
